<compile_context>
chip_gen: v7x
topology: tpu7x:2x2x1
jax: 0.10.0
libtpu: 0.0.40
codegen_flags: <defaults>
</compile_context>

<pallas_src>
import functools

import numpy as np
import jax
import jax.numpy as jnp
from jax.experimental import pallas as pl
from jax.experimental.pallas import tpu as pltpu


def _postnet_kernel(W, x_ref, mask_ref, wconv_ref, bconv_ref, wfc_ref, bfc_ref,
                    feat_ref, head_ref, stk_ref):
    # x_ref:     (B, Cpad, HW)    raw images, channels on sublanes, HW on lanes
    # mask_ref:  (9, 1, HW)       precomputed zero-padding validity masks (f32)
    # wconv_ref: (Cfeat, 9*Cpad)  fused conv weight, tap-major K
    # bconv_ref: (Cfeat, 1)
    # wfc_ref:   (Cfeat, K)       FC weight pre-scaled by 1/HW (mean-pool folded)
    # bfc_ref:   (1, K)
    # feat_ref:  (B, Cfeat, HW)   transposed feature map (lane-dense stores)
    # head_ref:  (B, 2, K)        [:,0]=logits, [:,1]=probs (K on lanes)
    # stk_ref:   (9*Cpad, B*HW)   VMEM scratch holding the stacked taps
    B, Cpad, HW = x_ref.shape
    Cfeat = feat_ref.shape[1]

    # Build the implicit-im2col operand with rolls + precomputed masks.
    # All stores below are sublane/lane tile-aligned full-chunk stores.
    for b in range(B):
        xb = x_ref[b]                                          # (Cpad, HW)
        for t in range(9):
            dh, dw = t // 3 - 1, t % 3 - 1
            if dh == 0 and dw == 0:
                tap = xb
            else:
                shift = dh * W + dw
                # xs[:, p] = x[:, (p + shift) mod HW]; wrapped lanes are masked to 0
                xs = pltpu.roll(xb, shift=(-shift) % HW, axis=1)
                tap = xs * mask_ref[t]                         # (Cpad,HW)*(1,HW)
            stk_ref[t * Cpad:(t + 1) * Cpad, b * HW:(b + 1) * HW] = tap

    # ONE fused MXU matmul over K = 9*Cpad, N = B*HW (f32 accumulation).
    acc = jnp.dot(wconv_ref[...], stk_ref[...],
                  preferred_element_type=jnp.float32)          # (Cfeat, B*HW)
    feat = jnp.maximum(acc + bconv_ref[...], 0.0)

    for b in range(B):
        fb = feat[:, b * HW:(b + 1) * HW]                      # lane-aligned slice
        feat_ref[b] = fb.astype(feat_ref.dtype)                # lane-dense store

        # Head (lane-major): mean-pool (1/HW folded into wfc) -> classifier -> softmax.
        pooled = jnp.sum(fb, axis=1, keepdims=True)            # (Cfeat, 1)
        logit = jnp.sum(pooled * wfc_ref[...], axis=0, keepdims=True) + bfc_ref[...]  # (1, K)
        m = jnp.max(logit, axis=-1, keepdims=True)
        e = jnp.exp(logit - m)
        prob = e / jnp.sum(e, axis=-1, keepdims=True)
        head_ref[b, 0:1, :] = logit.astype(head_ref.dtype)
        head_ref[b, 1:2, :] = prob.astype(head_ref.dtype)


def _pick_batch_block(N, HW, cpad, cfeat):
    """Images per grid step.

    Big enough to amortize the ~0.35us/step overhead, but keep >= 2 grid steps
    when N >= 2 (both v7x TensorCores get work under dimension_semantics
    ("parallel",)), and keep the per-step f32 working set small.
    """
    best = 1
    for b in range(1, N + 1):
        if N % b:
            continue
        if N >= 2 and N // b < 2:
            continue                                   # don't idle a v7x TC
        work = 2 * b * HW * 4 * (cpad + 9 * cpad + cfeat)   # x + taps + feat, x2 buffers
        if work > 24 * 1024 * 1024:
            continue
        best = max(best, b)
    return best


def posterior_network_forward(x_nchw, params, feature_dtype=jnp.float32):
    """Returns (feature [N,Cfeat,H,W], logits [N,K], probs [N,K]) like the PyTorch module.

    Pass feature_dtype=jnp.bfloat16 to halve the dominant HBM feature writeback
    when the consumer tolerates reduced precision (kernel is writeback-bound at
    realistic sizes).
    """
    wconv, bconv, wfc, bfc = params
    N, Cin, H, W = x_nchw.shape
    Cfeat = wconv.shape[-1]
    K = wfc.shape[-1]
    HW = H * W

    # Pad channels to a multiple of 8 so tap-stacking stores are tile-aligned.
    Cpad = ((Cin + 7) // 8) * 8
    x_flat = x_nchw.reshape(N, Cin, HW)                        # free reshape, no im2col
    if Cpad != Cin:
        x_flat = jnp.pad(x_flat, ((0, 0), (0, Cpad - Cin), (0, 0)))

    # Fused conv weight (HWIO -> (Cfeat, 9*Cpad), tap-major K; padded chans = 0).
    wconv_r = wconv.reshape(9, Cin, Cfeat)
    if Cpad != Cin:
        wconv_r = jnp.pad(wconv_r, ((0, 0), (0, Cpad - Cin), (0, 0)))
    wconv_fused = wconv_r.reshape(9 * Cpad, Cfeat).T.astype(jnp.float32)
    bconv_col = bconv.reshape(Cfeat, 1).astype(jnp.float32)
    wfc_scaled = (wfc * (1.0 / HW)).astype(jnp.float32)        # fold mean-pool scale
    bfc_row = bfc.reshape(1, K).astype(jnp.float32)

    # Zero-padding validity masks: static in (H, W, tap) -> trace-time constant.
    pos = np.arange(HW)
    row, col = pos // W, pos % W
    masks_np = np.ones((9, 1, HW), np.float32)
    for t in range(9):
        dh, dw = t // 3 - 1, t % 3 - 1
        valid = ((row + dh >= 0) & (row + dh < H) & (col + dw >= 0) & (col + dw < W))
        masks_np[t, 0, :] = valid.astype(np.float32)
    masks = jnp.asarray(masks_np)

    B = _pick_batch_block(N, HW, Cpad, Cfeat)
    grid = (N // B,)

    # VMEM limit derived from the actual block sizes (v7x budget is 64 MiB/TC).
    blk_in = B * Cpad * HW * 4
    blk_feat = B * Cfeat * HW * 4
    blk_head = B * 2 * max(K, 128) * 4
    stacked_bytes = 9 * Cpad * B * HW * 4
    const_bytes = (9 * 8 * HW + Cfeat * 9 * Cpad + 2 * Cfeat * 128 + 128) * 4
    vmem_limit = int(min(64 * 1024 * 1024,
                         max(16 * 1024 * 1024,
                             4 * (blk_in + blk_feat + blk_head)
                             + 2 * stacked_bytes + const_bytes)))

    kernel = functools.partial(_postnet_kernel, W)

    feat_t, head = pl.pallas_call(
        kernel,
        out_shape=(
            jax.ShapeDtypeStruct((N, Cfeat, HW), feature_dtype),
            jax.ShapeDtypeStruct((N, 2, K), jnp.float32),
        ),
        grid_spec=pltpu.PrefetchScalarGridSpec(
            num_scalar_prefetch=0,
            grid=grid,
            in_specs=[
                pl.BlockSpec((B, Cpad, HW), lambda n: (n, 0, 0)),      # image block
                pl.BlockSpec((9, 1, HW), lambda n: (0, 0, 0)),         # pad masks
                pl.BlockSpec((Cfeat, 9 * Cpad), lambda n: (0, 0)),     # fused conv W
                pl.BlockSpec((Cfeat, 1), lambda n: (0, 0)),            # conv b
                pl.BlockSpec((Cfeat, K), lambda n: (0, 0)),            # fc W / HW
                pl.BlockSpec((1, K), lambda n: (0, 0)),                # fc b
            ],
            out_specs=[
                pl.BlockSpec((B, Cfeat, HW), lambda n: (n, 0, 0)),     # feature (NCHW order)
                pl.BlockSpec((B, 2, K), lambda n: (n, 0, 0)),          # logits + probs
            ],
            scratch_shapes=[pltpu.VMEM((9 * Cpad, B * HW), jnp.float32)],
        ),
        compiler_params=pltpu.CompilerParams(
            dimension_semantics=("parallel",),
            vmem_limit_bytes=vmem_limit),
    )(x_flat, masks, wconv_fused, bconv_col, wfc_scaled, bfc_row)

    # (N, Cfeat, HW) is already NCHW-ordered -> free reshape, no transpose.
    feature = feat_t.reshape(N, Cfeat, H, W)
    logits = head[:, 0, :]
    probs = head[:, 1, :]
    return feature, logits, probs


def _im2col_3x3(x_nhwc):
    """Reference-only im2col (plain JAX)."""
    N, H, W, Cin = x_nhwc.shape
    x_pad = jnp.pad(x_nhwc, ((0, 0), (1, 1), (1, 1), (0, 0)))
    cols = []
    for kh in range(3):
        for kw in range(3):
            cols.append(x_pad[:, kh:kh + H, kw:kw + W, :])
    patches = jnp.concatenate(cols, axis=-1)
    return patches.reshape(N, H * W, 9 * Cin)


def _reference_forward(x_nchw, params):
    """Plain-JAX reference of the same backbone (for correctness check)."""
    wconv, bconv, wfc, bfc = params
    N, Cin, H, W = x_nchw.shape
    Cfeat = wconv.shape[-1]
    K = wfc.shape[-1]
    x_nhwc = jnp.transpose(x_nchw, (0, 2, 3, 1))
    patches = _im2col_3x3(x_nhwc)                                  # (N, HW, 9*Cin)
    feat = jnp.maximum(
        jnp.einsum('npk,kc->npc', patches, wconv.reshape(9 * Cin, Cfeat))
        + bconv.reshape(1, 1, Cfeat), 0.0)
    pooled = jnp.mean(feat, axis=1)                                # (N, Cfeat)
    logits = pooled @ wfc + bfc.reshape(1, K)
    probs = jax.nn.softmax(logits, axis=-1)
    feature = jnp.transpose(feat.reshape(N, H, W, Cfeat), (0, 3, 1, 2))
    return feature, logits, probs


if __name__ == "__main__":
    # small shapes consistent with an image-classification backbone
    N, Cin, H, W = 2, 4, 16, 16
    Cfeat, K = 8, 10

    key = jax.random.PRNGKey(0)
    kx, k1, k2, k3, k4 = jax.random.split(key, 5)

    x = jax.random.normal(kx, (N, Cin, H, W), jnp.float32)

    # deterministic synthetic parameters (conv HWIO, fc (in, out))
    wconv = jax.random.normal(k1, (3, 3, Cin, Cfeat), jnp.float32) * 0.1
    bconv = jax.random.normal(k2, (Cfeat,), jnp.float32) * 0.01
    wfc = jax.random.normal(k3, (Cfeat, K), jnp.float32) * 0.1
    bfc = jax.random.normal(k4, (K,), jnp.float32) * 0.01
    params = (wconv, bconv, wfc, bfc)

    feature, logits, probs = posterior_network_forward(x, params)
    jax.block_until_ready((feature, logits, probs))

    # sanity check against a plain-JAX reference of the same math
    f_ref, l_ref, p_ref = _reference_forward(x, params)
    assert feature.shape == (N, Cfeat, H, W)
    assert logits.shape == (N, K) and probs.shape == (N, K)
    assert jnp.allclose(feature, f_ref, atol=1e-5, rtol=1e-5)
    assert jnp.allclose(logits, l_ref, atol=1e-5, rtol=1e-5)
    assert jnp.allclose(probs, p_ref, atol=1e-5, rtol=1e-5)

    # TODO(synk): `criterion` (UCE loss + Dirichlet entropy via digamma/lgamma)
    # is a training-only loss, not part of forward(); not implemented as a kernel.

    print("KERNEL_OK")
</pallas_src>

<mosaic_0001>
module attributes {stable_mosaic.version = 11 : i64} {
  func.func @_postnet_kernel(%arg0: i32, %arg1: memref<1x8x256xf32, #tpu.memory_space<vmem>>, %arg2: memref<9x1x256xf32, #tpu.memory_space<vmem>>, %arg3: memref<8x72xf32, #tpu.memory_space<vmem>>, %arg4: memref<8x1xf32, #tpu.memory_space<vmem>>, %arg5: memref<8x10xf32, #tpu.memory_space<vmem>>, %arg6: memref<1x10xf32, #tpu.memory_space<vmem>>, %arg7: memref<1x8x256xf32, #tpu.memory_space<vmem>>, %arg8: memref<1x2x10xf32, #tpu.memory_space<vmem>>, %arg9: memref<72x256xf32, #tpu.memory_space<vmem>>) attributes {dimension_semantics = [#tpu.dimension_semantics<parallel>], iteration_bounds = array<i64: 2>, scalar_prefetch = 0 : i64, scratch_operands = 1 : i64, tpu.core_type = #tpu.core_type<tc>, window_params = [{transform_indices = @transform_0, window_bounds = array<i64: 1, 8, 256>}, {pipeline_mode = #tpu.pipeline_mode<synchronous>, transform_indices = @transform_1, window_bounds = array<i64: 9, 1, 256>}, {pipeline_mode = #tpu.pipeline_mode<synchronous>, transform_indices = @transform_2, window_bounds = array<i64: 8, 72>}, {pipeline_mode = #tpu.pipeline_mode<synchronous>, transform_indices = @transform_3, window_bounds = array<i64: 8, 1>}, {pipeline_mode = #tpu.pipeline_mode<synchronous>, transform_indices = @transform_4, window_bounds = array<i64: 8, 10>}, {pipeline_mode = #tpu.pipeline_mode<synchronous>, transform_indices = @transform_5, window_bounds = array<i64: 1, 10>}, {transform_indices = @transform_6, window_bounds = array<i64: 1, 8, 256>}, {transform_indices = @transform_7, window_bounds = array<i64: 1, 2, 10>}]} {
    %c0 = arith.constant 0 : index
    %c0_0 = arith.constant 0 : index
    %c0_1 = arith.constant 0 : index
    %0 = vector.load %arg1[%c0, %c0_0, %c0_1] : memref<1x8x256xf32, #tpu.memory_space<vmem>>, vector<1x8x256xf32>
    %1 = vector.shape_cast %0 : vector<1x8x256xf32> to vector<8x256xf32>
    %c17_i32 = arith.constant 17 : i32
    %2 = tpu.dynamic_rotate %1 by %c17_i32 dim 1 : vector<8x256xf32>, i32 -> vector<8x256xf32>
    %c0_2 = arith.constant 0 : index
    %c0_3 = arith.constant 0 : index
    %c0_4 = arith.constant 0 : index
    %3 = vector.load %arg2[%c0_2, %c0_3, %c0_4] : memref<9x1x256xf32, #tpu.memory_space<vmem>>, vector<1x1x256xf32>
    %4 = vector.shape_cast %3 : vector<1x1x256xf32> to vector<1x256xf32>
    %5 = vector.broadcast %4 : vector<1x256xf32> to vector<8x256xf32>
    %6 = arith.mulf %2, %5 : vector<8x256xf32>
    %c0_5 = arith.constant 0 : index
    %c0_6 = arith.constant 0 : index
    %7 = vector.load %arg9[%c0_5, %c0_6] : memref<72x256xf32, #tpu.memory_space<vmem>>, vector<8x256xf32>
    tpu.vector_store %arg9[%c0_5, %c0_6], %6 {strides = array<i32>} : memref<72x256xf32, #tpu.memory_space<vmem>>, vector<8x256xf32>,
    %c16_i32 = arith.constant 16 : i32
    %8 = tpu.dynamic_rotate %1 by %c16_i32 dim 1 : vector<8x256xf32>, i32 -> vector<8x256xf32>
    %c1 = arith.constant 1 : index
    %c0_7 = arith.constant 0 : index
    %c0_8 = arith.constant 0 : index
    %9 = vector.load %arg2[%c1, %c0_7, %c0_8] : memref<9x1x256xf32, #tpu.memory_space<vmem>>, vector<1x1x256xf32>
    %10 = vector.shape_cast %9 : vector<1x1x256xf32> to vector<1x256xf32>
    %11 = vector.broadcast %10 : vector<1x256xf32> to vector<8x256xf32>
    %12 = arith.mulf %8, %11 : vector<8x256xf32>
    %c8 = arith.constant 8 : index
    %c0_9 = arith.constant 0 : index
    %13 = vector.load %arg9[%c8, %c0_9] : memref<72x256xf32, #tpu.memory_space<vmem>>, vector<8x256xf32>
    tpu.vector_store %arg9[%c8, %c0_9], %12 {strides = array<i32>} : memref<72x256xf32, #tpu.memory_space<vmem>>, vector<8x256xf32>,
    %c15_i32 = arith.constant 15 : i32
    %14 = tpu.dynamic_rotate %1 by %c15_i32 dim 1 : vector<8x256xf32>, i32 -> vector<8x256xf32>
    %c2 = arith.constant 2 : index
    %c0_10 = arith.constant 0 : index
    %c0_11 = arith.constant 0 : index
    %15 = vector.load %arg2[%c2, %c0_10, %c0_11] : memref<9x1x256xf32, #tpu.memory_space<vmem>>, vector<1x1x256xf32>
    %16 = vector.shape_cast %15 : vector<1x1x256xf32> to vector<1x256xf32>
    %17 = vector.broadcast %16 : vector<1x256xf32> to vector<8x256xf32>
    %18 = arith.mulf %14, %17 : vector<8x256xf32>
    %c16 = arith.constant 16 : index
    %c0_12 = arith.constant 0 : index
    %19 = vector.load %arg9[%c16, %c0_12] : memref<72x256xf32, #tpu.memory_space<vmem>>, vector<8x256xf32>
    tpu.vector_store %arg9[%c16, %c0_12], %18 {strides = array<i32>} : memref<72x256xf32, #tpu.memory_space<vmem>>, vector<8x256xf32>,
    %c1_i32 = arith.constant 1 : i32
    %20 = tpu.dynamic_rotate %1 by %c1_i32 dim 1 : vector<8x256xf32>, i32 -> vector<8x256xf32>
    %c3 = arith.constant 3 : index
    %c0_13 = arith.constant 0 : index
    %c0_14 = arith.constant 0 : index
    %21 = vector.load %arg2[%c3, %c0_13, %c0_14] : memref<9x1x256xf32, #tpu.memory_space<vmem>>, vector<1x1x256xf32>
    %22 = vector.shape_cast %21 : vector<1x1x256xf32> to vector<1x256xf32>
    %23 = vector.broadcast %22 : vector<1x256xf32> to vector<8x256xf32>
    %24 = arith.mulf %20, %23 : vector<8x256xf32>
    %c24 = arith.constant 24 : index
    %c0_15 = arith.constant 0 : index
    %25 = vector.load %arg9[%c24, %c0_15] : memref<72x256xf32, #tpu.memory_space<vmem>>, vector<8x256xf32>
    tpu.vector_store %arg9[%c24, %c0_15], %24 {strides = array<i32>} : memref<72x256xf32, #tpu.memory_space<vmem>>, vector<8x256xf32>,
    %c32 = arith.constant 32 : index
    %c0_16 = arith.constant 0 : index
    %26 = vector.load %arg9[%c32, %c0_16] : memref<72x256xf32, #tpu.memory_space<vmem>>, vector<8x256xf32>
    tpu.vector_store %arg9[%c32, %c0_16], %1 {strides = array<i32>} : memref<72x256xf32, #tpu.memory_space<vmem>>, vector<8x256xf32>,
    %c255_i32 = arith.constant 255 : i32
    %27 = tpu.dynamic_rotate %1 by %c255_i32 dim 1 : vector<8x256xf32>, i32 -> vector<8x256xf32>
    %c5 = arith.constant 5 : index
    %c0_17 = arith.constant 0 : index
    %c0_18 = arith.constant 0 : index
    %28 = vector.load %arg2[%c5, %c0_17, %c0_18] : memref<9x1x256xf32, #tpu.memory_space<vmem>>, vector<1x1x256xf32>
    %29 = vector.shape_cast %28 : vector<1x1x256xf32> to vector<1x256xf32>
    %30 = vector.broadcast %29 : vector<1x256xf32> to vector<8x256xf32>
    %31 = arith.mulf %27, %30 : vector<8x256xf32>
    %c40 = arith.constant 40 : index
    %c0_19 = arith.constant 0 : index
    %32 = vector.load %arg9[%c40, %c0_19] : memref<72x256xf32, #tpu.memory_space<vmem>>, vector<8x256xf32>
    tpu.vector_store %arg9[%c40, %c0_19], %31 {strides = array<i32>} : memref<72x256xf32, #tpu.memory_space<vmem>>, vector<8x256xf32>,
    %c241_i32 = arith.constant 241 : i32
    %33 = tpu.dynamic_rotate %1 by %c241_i32 dim 1 : vector<8x256xf32>, i32 -> vector<8x256xf32>
    %c6 = arith.constant 6 : index
    %c0_20 = arith.constant 0 : index
    %c0_21 = arith.constant 0 : index
    %34 = vector.load %arg2[%c6, %c0_20, %c0_21] : memref<9x1x256xf32, #tpu.memory_space<vmem>>, vector<1x1x256xf32>
    %35 = vector.shape_cast %34 : vector<1x1x256xf32> to vector<1x256xf32>
    %36 = vector.broadcast %35 : vector<1x256xf32> to vector<8x256xf32>
    %37 = arith.mulf %33, %36 : vector<8x256xf32>
    %c48 = arith.constant 48 : index
    %c0_22 = arith.constant 0 : index
    %38 = vector.load %arg9[%c48, %c0_22] : memref<72x256xf32, #tpu.memory_space<vmem>>, vector<8x256xf32>
    tpu.vector_store %arg9[%c48, %c0_22], %37 {strides = array<i32>} : memref<72x256xf32, #tpu.memory_space<vmem>>, vector<8x256xf32>,
    %c240_i32 = arith.constant 240 : i32
    %39 = tpu.dynamic_rotate %1 by %c240_i32 dim 1 : vector<8x256xf32>, i32 -> vector<8x256xf32>
    %c7 = arith.constant 7 : index
    %c0_23 = arith.constant 0 : index
    %c0_24 = arith.constant 0 : index
    %40 = vector.load %arg2[%c7, %c0_23, %c0_24] : memref<9x1x256xf32, #tpu.memory_space<vmem>>, vector<1x1x256xf32>
    %41 = vector.shape_cast %40 : vector<1x1x256xf32> to vector<1x256xf32>
    %42 = vector.broadcast %41 : vector<1x256xf32> to vector<8x256xf32>
    %43 = arith.mulf %39, %42 : vector<8x256xf32>
    %c56 = arith.constant 56 : index
    %c0_25 = arith.constant 0 : index
    %44 = vector.load %arg9[%c56, %c0_25] : memref<72x256xf32, #tpu.memory_space<vmem>>, vector<8x256xf32>
    tpu.vector_store %arg9[%c56, %c0_25], %43 {strides = array<i32>} : memref<72x256xf32, #tpu.memory_space<vmem>>, vector<8x256xf32>,
    %c239_i32 = arith.constant 239 : i32
    %45 = tpu.dynamic_rotate %1 by %c239_i32 dim 1 : vector<8x256xf32>, i32 -> vector<8x256xf32>
    %c8_26 = arith.constant 8 : index
    %c0_27 = arith.constant 0 : index
    %c0_28 = arith.constant 0 : index
    %46 = vector.load %arg2[%c8_26, %c0_27, %c0_28] : memref<9x1x256xf32, #tpu.memory_space<vmem>>, vector<1x1x256xf32>
    %47 = vector.shape_cast %46 : vector<1x1x256xf32> to vector<1x256xf32>
    %48 = vector.broadcast %47 : vector<1x256xf32> to vector<8x256xf32>
    %49 = arith.mulf %45, %48 : vector<8x256xf32>
    %c64 = arith.constant 64 : index
    %c0_29 = arith.constant 0 : index
    %50 = vector.load %arg9[%c64, %c0_29] : memref<72x256xf32, #tpu.memory_space<vmem>>, vector<8x256xf32>
    tpu.vector_store %arg9[%c64, %c0_29], %49 {strides = array<i32>} : memref<72x256xf32, #tpu.memory_space<vmem>>, vector<8x256xf32>,
    %c0_30 = arith.constant 0 : index
    %c0_31 = arith.constant 0 : index
    %51 = vector.load %arg3[%c0_30, %c0_31] : memref<8x72xf32, #tpu.memory_space<vmem>>, vector<8x72xf32>
    %c0_32 = arith.constant 0 : index
    %c0_33 = arith.constant 0 : index
    %52 = vector.load %arg9[%c0_32, %c0_33] : memref<72x256xf32, #tpu.memory_space<vmem>>, vector<72x256xf32>
    %cst = arith.constant dense<0.000000e+00> : vector<8x256xf32>
    %53 = tpu.matmul %51, %52, %cst {dimension_numbers = #tpu.dot_dimension_numbers<[1], [0], [0], [1], [0, 0, 1, 1], [], []>} : vector<8x72xf32>, vector<72x256xf32>, vector<8x256xf32> -> vector<8x256xf32>
    %c0_34 = arith.constant 0 : index
    %c0_35 = arith.constant 0 : index
    %54 = vector.load %arg4[%c0_34, %c0_35] : memref<8x1xf32, #tpu.memory_space<vmem>>, vector<8x1xf32>
    %55 = vector.broadcast %54 : vector<8x1xf32> to vector<8x256xf32>
    %56 = arith.addf %53, %55 : vector<8x256xf32>
    %cst_36 = arith.constant 0.000000e+00 : f32
    %57 = vector.broadcast %cst_36 : f32 to vector<8x256xf32>
    %58 = arith.maximumf %56, %57 : vector<8x256xf32>
    %c0_37 = arith.constant 0 : index
    %c0_38 = arith.constant 0 : index
    %c0_39 = arith.constant 0 : index
    %59 = vector.load %arg7[%c0_37, %c0_38, %c0_39] : memref<1x8x256xf32, #tpu.memory_space<vmem>>, vector<1x8x256xf32>
    %60 = vector.shape_cast %59 : vector<1x8x256xf32> to vector<8x256xf32>
    %61 = vector.shape_cast %58 : vector<8x256xf32> to vector<1x8x256xf32>
    tpu.vector_store %arg7[%c0_37, %c0_38, %c0_39], %61 {strides = array<i32>} : memref<1x8x256xf32, #tpu.memory_space<vmem>>, vector<1x8x256xf32>,
    %cst_40 = arith.constant dense<0.000000e+00> : vector<8xf32>
    %62 = vector.multi_reduction <add>, %58, %cst_40 [1] : vector<8x256xf32> to vector<8xf32>
    %63 = vector.shape_cast %62 : vector<8xf32> to vector<8x1xf32>
    %c0_41 = arith.constant 0 : index
    %c0_42 = arith.constant 0 : index
    %64 = vector.load %arg5[%c0_41, %c0_42] : memref<8x10xf32, #tpu.memory_space<vmem>>, vector<8x10xf32>
    %65 = vector.broadcast %63 : vector<8x1xf32> to vector<8x10xf32>
    %66 = arith.mulf %65, %64 : vector<8x10xf32>
    %cst_43 = arith.constant dense<0.000000e+00> : vector<10xf32>
    %67 = vector.multi_reduction <add>, %66, %cst_43 [0] : vector<8x10xf32> to vector<10xf32>
    %68 = vector.shape_cast %67 : vector<10xf32> to vector<1x10xf32>
    %c0_44 = arith.constant 0 : index
    %c0_45 = arith.constant 0 : index
    %69 = vector.load %arg6[%c0_44, %c0_45] : memref<1x10xf32, #tpu.memory_space<vmem>>, vector<1x10xf32>
    %70 = arith.addf %68, %69 : vector<1x10xf32>
    %cst_46 = arith.constant dense<0xFF800000> : vector<1xf32>
    %71 = vector.multi_reduction <maximumf>, %70, %cst_46 [1] : vector<1x10xf32> to vector<1xf32>
    %72 = vector.shape_cast %71 : vector<1xf32> to vector<1x1xf32>
    %73 = vector.broadcast %72 : vector<1x1xf32> to vector<1x10xf32>
    %74 = arith.subf %70, %73 : vector<1x10xf32>
    %75 = math.exp %74 : vector<1x10xf32>
    %cst_47 = arith.constant dense<0.000000e+00> : vector<1xf32>
    %76 = vector.multi_reduction <add>, %75, %cst_47 [1] : vector<1x10xf32> to vector<1xf32>
    %77 = vector.shape_cast %76 : vector<1xf32> to vector<1x1xf32>
    %78 = vector.broadcast %77 : vector<1x1xf32> to vector<1x10xf32>
    %79 = arith.divf %75, %78 : vector<1x10xf32>
    %c0_48 = arith.constant 0 : index
    %c0_49 = arith.constant 0 : index
    %c0_50 = arith.constant 0 : index
    %80 = vector.load %arg8[%c0_48, %c0_49, %c0_50] : memref<1x2x10xf32, #tpu.memory_space<vmem>>, vector<1x1x10xf32>
    %81 = vector.shape_cast %80 : vector<1x1x10xf32> to vector<1x10xf32>
    %82 = vector.shape_cast %70 : vector<1x10xf32> to vector<1x1x10xf32>
    tpu.vector_store %arg8[%c0_48, %c0_49, %c0_50], %82 {strides = array<i32>} : memref<1x2x10xf32, #tpu.memory_space<vmem>>, vector<1x1x10xf32>,
    %c0_51 = arith.constant 0 : index
    %c1_52 = arith.constant 1 : index
    %c0_53 = arith.constant 0 : index
    %83 = vector.load %arg8[%c0_51, %c1_52, %c0_53] : memref<1x2x10xf32, #tpu.memory_space<vmem>>, vector<1x1x10xf32>
    %84 = vector.shape_cast %83 : vector<1x1x10xf32> to vector<1x10xf32>
    %85 = vector.shape_cast %79 : vector<1x10xf32> to vector<1x1x10xf32>
    tpu.vector_store %arg8[%c0_51, %c1_52, %c0_53], %85 {strides = array<i32>} : memref<1x2x10xf32, #tpu.memory_space<vmem>>, vector<1x1x10xf32>,
    return
  }
  func.func @transform_0(%arg0: i32) -> (i32, i32, i32) {
    %c0_i32 = arith.constant 0 : i32
    %c0_i32_0 = arith.constant 0 : i32
    %c0_i32_1 = arith.constant 0 : i32
    return %arg0, %c0_i32, %c0_i32_0 : i32, i32, i32
  }
  func.func @transform_1(%arg0: i32) -> (i32, i32, i32) {
    %c0_i32 = arith.constant 0 : i32
    %c0_i32_0 = arith.constant 0 : i32
    %c0_i32_1 = arith.constant 0 : i32
    %c0_i32_2 = arith.constant 0 : i32
    return %c0_i32, %c0_i32_0, %c0_i32_1 : i32, i32, i32
  }
  func.func @transform_2(%arg0: i32) -> (i32, i32) {
    %c0_i32 = arith.constant 0 : i32
    %c0_i32_0 = arith.constant 0 : i32
    %c0_i32_1 = arith.constant 0 : i32
    return %c0_i32, %c0_i32_0 : i32, i32
  }
  func.func @transform_3(%arg0: i32) -> (i32, i32) {
    %c0_i32 = arith.constant 0 : i32
    %c0_i32_0 = arith.constant 0 : i32
    %c0_i32_1 = arith.constant 0 : i32
    return %c0_i32, %c0_i32_0 : i32, i32
  }
  func.func @transform_4(%arg0: i32) -> (i32, i32) {
    %c0_i32 = arith.constant 0 : i32
    %c0_i32_0 = arith.constant 0 : i32
    %c0_i32_1 = arith.constant 0 : i32
    return %c0_i32, %c0_i32_0 : i32, i32
  }
  func.func @transform_5(%arg0: i32) -> (i32, i32) {
    %c0_i32 = arith.constant 0 : i32
    %c0_i32_0 = arith.constant 0 : i32
    %c0_i32_1 = arith.constant 0 : i32
    return %c0_i32, %c0_i32_0 : i32, i32
  }
  func.func @transform_6(%arg0: i32) -> (i32, i32, i32) {
    %c0_i32 = arith.constant 0 : i32
    %c0_i32_0 = arith.constant 0 : i32
    %c0_i32_1 = arith.constant 0 : i32
    return %arg0, %c0_i32, %c0_i32_0 : i32, i32, i32
  }
  func.func @transform_7(%arg0: i32) -> (i32, i32, i32) {
    %c0_i32 = arith.constant 0 : i32
    %c0_i32_0 = arith.constant 0 : i32
    %c0_i32_1 = arith.constant 0 : i32
    return %arg0, %c0_i32, %c0_i32_0 : i32, i32, i32
  }
}

</mosaic_0001>

<llo_original>
// kernel: tpu_custom_call.1
$region0: #{tpu_custom_call.1}
  #allocation0 [shape = 'u32[]', space=smem, size = 0x4, offset = 0x4, fixed_abs, tag = 'smem constant byte address 0x4 - core index']
  #allocation1 [shape = 'u32[144,128]{1,0:T(1,128)}', space=vmem, size = 0x12000, scoped, tag = 'internal scratch']
  #allocation2 [shape = 'f32[72,256]{1,0:T(8,128)}', space=vmem, size = 0x12000, scoped, tag = 'scratch operand']
  %s0 = inlined_call_operand.hbm [shape: f32[2,8,256], index: 0, kind: input, shape index: {}]
  %s1 = inlined_call_operand.hbm [shape: f32[9,1,256], index: 1, kind: input, shape index: {}]
  %s2 = inlined_call_operand.vmem [shape: f32[8,72], index: 2, kind: input, shape index: {}]
  %s3 = inlined_call_operand.vmem [shape: f32[8,1], index: 3, kind: input, shape index: {}]
  %s4 = inlined_call_operand.vmem [shape: f32[8,10], index: 4, kind: input, shape index: {}]
  %s5 = inlined_call_operand.vmem [shape: f32[1,10], index: 5, kind: input, shape index: {}]
  %s6 = inlined_call_operand.hbm [shape: f32[2,8,256], index: 6, kind: output, shape index: {0}]
  %s7 = inlined_call_operand.hbm [shape: f32[2,2,10], index: 7, kind: output, shape index: {1}]
  %8 = xla_tuple %s6, %s7
  %s9 = sld [smem:[#allocation0]]
  $region73: #{tpu_custom_call.1} parent=0
    _
  %s11 = ssub.s32 1, %s9
  %s12 = scalar_select 0, %s11, %s9
  $region1: #{tpu_custom_call.1} parent=0
    #allocation3 [shape = 'u8[16384]{0}', space=vmem, size = 0x4000, scoped, tag = 'input window, operand 0']
    #allocation4 [shape = 's32[2]{0}', space=sflag, size = 0x8, scoped, tag = 'scoped memory for tpu_custom_call.1']
    #allocation5 [shape = 's32[2]{0}', space=sflag, size = 0x8, scoped, tag = 'scoped memory for tpu_custom_call.1']
    #allocation6 [shape = 'u8[9216]{0}', space=vmem, size = 0x2400, scoped, tag = 'input window, operand 1, single buffered']
    #allocation7 [shape = 's32[1]{0}', space=sflag, size = 0x4, scoped, tag = 'scoped memory for tpu_custom_call.1']
    #allocation8 [shape = 'u8[16384]{0}', space=vmem, size = 0x4000, scoped, tag = 'output window, operand 0']
    #allocation9 [shape = 'u8[2048]{0}', space=vmem, size = 0x800, scoped, tag = 'output window, operand 1']
    #allocation10 [shape = 's32[2]{0}', space=sflag, size = 0x8, scoped, tag = 'scoped memory for tpu_custom_call.1']
    %13 = vsyncpa [#allocation4], 0
    %s14 = scalar_lea.sflag [#allocation4], 1
    %15 = vsyncpa %s14, 0
    %16 = vsyncpa [#allocation7], 0
    %17 = vsyncpa [#allocation5], 0
    %s18 = scalar_lea.sflag [#allocation5], 1
    %19 = vsyncpa %s18, 0
    %20 = vsyncpa [#allocation10], 0
    %s21 = scalar_lea.sflag [#allocation10], 1
    %22 = vsyncpa %s21, 0
    loop: start=0, step=1, limit=4
    $region2: #{tpu_custom_call.1} parent=1 // loop_pre_header
      _
    $region3: #{tpu_custom_call.1} parent=1 // loop_header
      %s24 = sphi 0, %s28
      %p25 = scmp.ge.s32.totalorder %s24, 4
      %s34 = sphi 0, %s36
      %s37 = sphi 0, %s34
      %s38 = sphi 0, %s37
      %s54 = sphi 0, %s38
      %s58 = sphi 0, %s58
      %s60 = sphi 0, %s58
      %s61 = sphi 0, %s60
      %s75 = sphi 0, %s61
      %s79 = sphi 0, %s79
      %s81 = sphi 0, %s79
      %s82 = sphi 0, %s81
      %s96 = sphi 0, %s82
      %s100 = sphi 0, %s100
      %s102 = sphi 0, %s100
      %s103 = sphi 0, %s102
      %s117 = sphi 0, %s103
      %s121 = sphi 0, %s121
      %s123 = sphi 0, %s121
      %s124 = sphi 0, %s123
      %s138 = sphi 0, %s124
      %s142 = sphi 0, %s142
      %s144 = sphi 0, %s142
      %s145 = sphi 0, %s144
      %s159 = sphi 0, %s145
      %s165 = sphi 0, %s167
      %s168 = sphi 0, %s165
      %s169 = sphi 0, %s168
      %s185 = sphi 0, %s169
      %s191 = sphi 0, %s193
      %s194 = sphi 0, %s191
      %s195 = sphi 0, %s194
      %s211 = sphi 0, %s195
    $region4: #{tpu_custom_call.1} parent=1 // loop_header_branch
      %27 = sbr.rel (%p25) target = $region8
    $region5: #{tpu_custom_call.1} parent=1 // loop_body
      %s29 = ssub.s32 %s24, 1
      %s30 = ssub.s32 %s24, 2
      %s31 = sadd.s32 %s24, 1
      %s32 = ssub.s32 %s24, %s31
      %p33 = scmp.eq.s32.totalorder %s32, 0
      %s35 = sadd.s32 %s34, 1
      %s36 = scalar_select %p33, %s34, %s35
      %p39 = pneg %p33
      %p40 = scmp.eq.s32.totalorder %s24, 1
      %p41 = por %p39, %p40
      %p42 = scmp.ne.s32.totalorder %s34, %s37
      %p43 = scmp.eq.s32.totalorder %s24, 0
      %p44 = por %p42, %p43
      %p45 = scmp.ne.s32.totalorder %s34, %s37
      %p46 = scmp.eq.s32.totalorder %s29, 1
      %p47 = por %p45, %p46
      %p48 = scmp.ne.s32.totalorder %s37, %s38
      %p49 = scmp.eq.s32.totalorder %s29, 0
      %p50 = por %p48, %p49
      %p51 = scmp.ne.s32.totalorder %s37, %s38
      %p52 = scmp.eq.s32.totalorder %s30, 1
      %p53 = por %p51, %p52
      %p55 = scmp.ne.s32.totalorder %s38, %s54
      %p56 = scmp.eq.s32.totalorder %s30, 0
      %p57 = por %p55, %p56
      %s59 = sadd.s32 %s58, 1
      %p62 = scmp.eq.s32.totalorder %s24, 1
      %p63 = scmp.ne.s32.totalorder %s58, %s60
      %p64 = scmp.eq.s32.totalorder %s24, 0
      %p65 = por %p63, %p64
      %p66 = scmp.ne.s32.totalorder %s58, %s60
      %p67 = scmp.eq.s32.totalorder %s29, 1
      %p68 = por %p66, %p67
      %p69 = scmp.ne.s32.totalorder %s60, %s61
      %p70 = scmp.eq.s32.totalorder %s29, 0
      %p71 = por %p69, %p70
      %p72 = scmp.ne.s32.totalorder %s60, %s61
      %p73 = scmp.eq.s32.totalorder %s30, 1
      %p74 = por %p72, %p73
      %p76 = scmp.ne.s32.totalorder %s61, %s75
      %p77 = scmp.eq.s32.totalorder %s30, 0
      %p78 = por %p76, %p77
      %s80 = sadd.s32 %s79, 1
      %p83 = scmp.eq.s32.totalorder %s24, 1
      %p84 = scmp.ne.s32.totalorder %s79, %s81
      %p85 = scmp.eq.s32.totalorder %s24, 0
      %p86 = por %p84, %p85
      %p87 = scmp.ne.s32.totalorder %s79, %s81
      %p88 = scmp.eq.s32.totalorder %s29, 1
      %p89 = por %p87, %p88
      %p90 = scmp.ne.s32.totalorder %s81, %s82
      %p91 = scmp.eq.s32.totalorder %s29, 0
      %p92 = por %p90, %p91
      %p93 = scmp.ne.s32.totalorder %s81, %s82
      %p94 = scmp.eq.s32.totalorder %s30, 1
      %p95 = por %p93, %p94
      %p97 = scmp.ne.s32.totalorder %s82, %s96
      %p98 = scmp.eq.s32.totalorder %s30, 0
      %p99 = por %p97, %p98
      %s101 = sadd.s32 %s100, 1
      %p104 = scmp.eq.s32.totalorder %s24, 1
      %p105 = scmp.ne.s32.totalorder %s100, %s102
      %p106 = scmp.eq.s32.totalorder %s24, 0
      %p107 = por %p105, %p106
      %p108 = scmp.ne.s32.totalorder %s100, %s102
      %p109 = scmp.eq.s32.totalorder %s29, 1
      %p110 = por %p108, %p109
      %p111 = scmp.ne.s32.totalorder %s102, %s103
      %p112 = scmp.eq.s32.totalorder %s29, 0
      %p113 = por %p111, %p112
      %p114 = scmp.ne.s32.totalorder %s102, %s103
      %p115 = scmp.eq.s32.totalorder %s30, 1
      %p116 = por %p114, %p115
      %p118 = scmp.ne.s32.totalorder %s103, %s117
      %p119 = scmp.eq.s32.totalorder %s30, 0
      %p120 = por %p118, %p119
      %s122 = sadd.s32 %s121, 1
      %p125 = scmp.eq.s32.totalorder %s24, 1
      %p126 = scmp.ne.s32.totalorder %s121, %s123
      %p127 = scmp.eq.s32.totalorder %s24, 0
      %p128 = por %p126, %p127
      %p129 = scmp.ne.s32.totalorder %s121, %s123
      %p130 = scmp.eq.s32.totalorder %s29, 1
      %p131 = por %p129, %p130
      %p132 = scmp.ne.s32.totalorder %s123, %s124
      %p133 = scmp.eq.s32.totalorder %s29, 0
      %p134 = por %p132, %p133
      %p135 = scmp.ne.s32.totalorder %s123, %s124
      %p136 = scmp.eq.s32.totalorder %s30, 1
      %p137 = por %p135, %p136
      %p139 = scmp.ne.s32.totalorder %s124, %s138
      %p140 = scmp.eq.s32.totalorder %s30, 0
      %p141 = por %p139, %p140
      %s143 = sadd.s32 %s142, 1
      %p146 = scmp.eq.s32.totalorder %s24, 1
      %p147 = scmp.ne.s32.totalorder %s142, %s144
      %p148 = scmp.eq.s32.totalorder %s24, 0
      %p149 = por %p147, %p148
      %p150 = scmp.ne.s32.totalorder %s142, %s144
      %p151 = scmp.eq.s32.totalorder %s29, 1
      %p152 = por %p150, %p151
      %p153 = scmp.ne.s32.totalorder %s144, %s145
      %p154 = scmp.eq.s32.totalorder %s29, 0
      %p155 = por %p153, %p154
      %p156 = scmp.ne.s32.totalorder %s144, %s145
      %p157 = scmp.eq.s32.totalorder %s30, 1
      %p158 = por %p156, %p157
      %p160 = scmp.ne.s32.totalorder %s145, %s159
      %p161 = scmp.eq.s32.totalorder %s30, 0
      %p162 = por %p160, %p161
      %s163 = ssub.s32 %s24, %s31
      %p164 = scmp.eq.s32.totalorder %s163, 0
      %s166 = sadd.s32 %s165, 1
      %s167 = scalar_select %p164, %s165, %s166
      %p170 = pneg %p164
      %p171 = scmp.eq.s32.totalorder %s24, 1
      %p172 = por %p170, %p171
      %p173 = scmp.ne.s32.totalorder %s165, %s168
      %p174 = scmp.eq.s32.totalorder %s24, 0
      %p175 = por %p173, %p174
      %p176 = scmp.ne.s32.totalorder %s165, %s168
      %p177 = scmp.eq.s32.totalorder %s29, 1
      %p178 = por %p176, %p177
      %p179 = scmp.ne.s32.totalorder %s168, %s169
      %p180 = scmp.eq.s32.totalorder %s29, 0
      %p181 = por %p179, %p180
      %p182 = scmp.ne.s32.totalorder %s168, %s169
      %p183 = scmp.eq.s32.totalorder %s30, 1
      %p184 = por %p182, %p183
      %p186 = scmp.ne.s32.totalorder %s169, %s185
      %p187 = scmp.eq.s32.totalorder %s30, 0
      %p188 = por %p186, %p187
      %s189 = ssub.s32 %s24, %s31
      %p190 = scmp.eq.s32.totalorder %s189, 0
      %s192 = sadd.s32 %s191, 1
      %s193 = scalar_select %p190, %s191, %s192
      %p196 = pneg %p190
      %p197 = scmp.eq.s32.totalorder %s24, 1
      %p198 = por %p196, %p197
      %p199 = scmp.ne.s32.totalorder %s191, %s194
      %p200 = scmp.eq.s32.totalorder %s24, 0
      %p201 = por %p199, %p200
      %p202 = scmp.ne.s32.totalorder %s191, %s194
      %p203 = scmp.eq.s32.totalorder %s29, 1
      %p204 = por %p202, %p203
      %p205 = scmp.ne.s32.totalorder %s194, %s195
      %p206 = scmp.eq.s32.totalorder %s29, 0
      %p207 = por %p205, %p206
      %p208 = scmp.ne.s32.totalorder %s194, %s195
      %p209 = scmp.eq.s32.totalorder %s30, 1
      %p210 = por %p208, %p209
      %p212 = scmp.ne.s32.totalorder %s195, %s211
      %p213 = scmp.eq.s32.totalorder %s30, 0
      %p214 = por %p212, %p213
      %p215 = scmp.le.s32.totalorder 1, %s24
      %p216 = scmp.lt.s32.totalorder %s24, 3
      %p217 = pnand %p215, %p216
      %p218 = pneg %p217
      // Predicated region
      $region9: #{tpu_custom_call.1} parent=5 // pred_check
        _
      $region10: #{tpu_custom_call.1} parent=5 // pred_check_branch
        %220 = sbr.rel (%p217) target = $region12
      $region11: #{tpu_custom_call.1} parent=5 // pred_region
        %s221 = ssub.s32 %s24, 1
        // Predicated region
        $region13: #{tpu_custom_call.1} parent=11 // pred_check
          %p222 = pneg %p71
        $region14: #{tpu_custom_call.1} parent=11 // pred_check_branch
          %224 = sbr.rel (%p222) target = $region16
        $region15: #{tpu_custom_call.1} parent=11 // pred_region
          %s226 = ssub.s32 288, 288
          %227 = vsyncadd [#allocation7], %s226
          %s228 = sshll.u32 [#allocation6], 4
          %s229 = int_to_ptr.vmem [resolvable:$true] %s228
          %234 = dma.hbm_to_vmem [thread:$0]  %s1, 288, %s229, [#allocation7], 32, 32, 2
        $region16: #{tpu_custom_call.1} parent=11 // pred_fallthru
          _
        // Predicated region
        $region17: #{tpu_custom_call.1} parent=11 // pred_check
          %p235 = pneg %p92
        $region18: #{tpu_custom_call.1} parent=11 // pred_check_branch
          %237 = sbr.rel (%p235) target = $region20
        $region19: #{tpu_custom_call.1} parent=11 // pred_region
          _
        $region20: #{tpu_custom_call.1} parent=11 // pred_fallthru
          _
        // Predicated region
        $region21: #{tpu_custom_call.1} parent=11 // pred_check
          %p238 = pneg %p113
        $region22: #{tpu_custom_call.1} parent=11 // pred_check_branch
          %240 = sbr.rel (%p238) target = $region24
        $region23: #{tpu_custom_call.1} parent=11 // pred_region
          _
        $region24: #{tpu_custom_call.1} parent=11 // pred_fallthru
          _
        // Predicated region
        $region25: #{tpu_custom_call.1} parent=11 // pred_check
          %p241 = pneg %p134
        $region26: #{tpu_custom_call.1} parent=11 // pred_check_branch
          %243 = sbr.rel (%p241) target = $region28
        $region27: #{tpu_custom_call.1} parent=11 // pred_region
          _
        $region28: #{tpu_custom_call.1} parent=11 // pred_fallthru
          _
        // Predicated region
        $region29: #{tpu_custom_call.1} parent=11 // pred_check
          %p244 = pneg %p155
        $region30: #{tpu_custom_call.1} parent=11 // pred_check_branch
          %246 = sbr.rel (%p244) target = $region32
        $region31: #{tpu_custom_call.1} parent=11 // pred_region
          _
        $region32: #{tpu_custom_call.1} parent=11 // pred_fallthru
          _
      $region12: #{tpu_custom_call.1} parent=5 // pred_fallthru
        _
      %p247 = scmp.lt.s32.totalorder %s24, 2
      // Predicated region
      $region33: #{tpu_custom_call.1} parent=5 // pred_check
        %p248 = pneg %p247
      $region34: #{tpu_custom_call.1} parent=5 // pred_check_branch
        %250 = sbr.rel (%p248) target = $region36
      $region35: #{tpu_custom_call.1} parent=5 // pred_region
        // Predicated region
        $region37: #{tpu_custom_call.1} parent=35 // pred_check
          %p251 = pneg %p44
        $region38: #{tpu_custom_call.1} parent=35 // pred_check_branch
          %253 = sbr.rel (%p251) target = $region40
        $region39: #{tpu_custom_call.1} parent=35 // pred_region
          %s254 = sand.u32 %s34, 1
          %s255 = scalar_lea.sflag [#allocation4], %s254
          %s256 = sand.u32 %s34, 1
          %s257 = smul.addr %s256, 16
          %s258 = scalar_lea.vmem [#allocation3], %s257
          %s260 = ssub.s32 256, 256
          %261 = vsyncadd %s255, %s260
          %s262 = smul.addr %s24, 2
          %s263 = smul.addr %s262, 128
          %s264 = scalar_lea.hbm %s0, %s263
          %s266 = sshll.u32 %s258, 4
          %s267 = int_to_ptr.vmem [resolvable:$true] %s266
          %269 = dma.hbm_to_vmem [thread:$0]  %s264, 256, %s267, %s255
        $region40: #{tpu_custom_call.1} parent=35 // pred_fallthru
          _
      $region36: #{tpu_custom_call.1} parent=5 // pred_fallthru
        _
      %p270 = scmp.le.s32.totalorder 1, %s24
      %p271 = scmp.lt.s32.totalorder %s24, 3
      %p272 = pnand %p270, %p271
      %p273 = pneg %p272
      // Predicated region
      $region41: #{tpu_custom_call.1} parent=5 // pred_check
        _
      $region42: #{tpu_custom_call.1} parent=5 // pred_check_branch
        %275 = sbr.rel (%p272) target = $region44
      $region43: #{tpu_custom_call.1} parent=5 // pred_region
        %s276 = ssub.s32 %s24, 1
        %s277 = sand.u32 %s37, 1
        %s278 = scalar_lea.sflag [#allocation4], %s277
        %s279 = sand.u32 %s37, 1
        %s280 = smul.addr %s279, 16
        %s281 = scalar_lea.vmem [#allocation3], %s280
        // Predicated region
        $region45: #{tpu_custom_call.1} parent=43 // pred_check
          %p282 = pneg %p50
        $region46: #{tpu_custom_call.1} parent=43 // pred_check_branch
          %284 = sbr.rel (%p282) target = $region48
        $region47: #{tpu_custom_call.1} parent=43 // pred_region
          %285 = dma.done %s278, 256
        $region48: #{tpu_custom_call.1} parent=43 // pred_fallthru
          _
        // Predicated region
        $region49: #{tpu_custom_call.1} parent=43 // pred_check
          %p286 = pneg %p71
        $region50: #{tpu_custom_call.1} parent=43 // pred_check_branch
          %288 = sbr.rel (%p286) target = $region52
        $region51: #{tpu_custom_call.1} parent=43 // pred_region
          %289 = dma.done [#allocation7], 288
        $region52: #{tpu_custom_call.1} parent=43 // pred_fallthru
          _
        %s290 = sand.u32 %s37, 1
        %s291 = scalar_lea.sflag [#allocation4], %s290
        %s292 = sand.u32 %s37, 1
        %s293 = smul.addr %s292, 16
        %s294 = scalar_lea.vmem [#allocation3], %s293
        %p295 = pneg %p50
        %p296 = pneg %p47
        %p297 = pneg %p71
        %p298 = pneg %p68
        %p299 = pneg %p92
        %p300 = pneg %p89
        %p301 = pneg %p113
        %p302 = pneg %p110
        %p303 = pneg %p134
        %p304 = pneg %p131
        %p305 = pneg %p155
        %p306 = pneg %p152
        %p307 = pneg %p181
        %p308 = pneg %p178
        %s309 = sand.u32 %s168, 1
        %s310 = scalar_lea.sflag [#allocation5], %s309
        %s311 = sand.u32 %s168, 1
        %s312 = smul.addr %s311, 16
        %s313 = scalar_lea.vmem [#allocation8], %s312
        %p314 = pneg %p207
        %p315 = pneg %p204
        %s316 = sand.u32 %s194, 1
        %s317 = scalar_lea.sflag [#allocation10], %s316
        %s318 = sand.u32 %s194, 1
        %s319 = smul.addr %s318, 2
        %s320 = scalar_lea.vmem [#allocation9], %s319
        %v321 = vld [vmem:[%s281] sm:$0xff]
        %v322 = vld [vmem:[%s281 + $0x8] sm:$0xff]
        %323 = vrot.lane.b32.xlu0 %v321, 17
        %v324 = vpop.permute.xlu0 %323
        %325 = vrot.lane.b32.xlu0 %v322, 17
        %v326 = vpop.permute.xlu0 %325
        %v327 = vlaneseq
        %v328 = vand.u32 %v327, 127
        %vm329 = vcmp.lt.s32.totalorder %v328, 17
        %v330 = vsel %vm329, %v324, %v326
        %v331 = vsel %vm329, %v326, %v324
        %v332 = vld [vmem:[#allocation6] sm:$0x3]
        %v334 = vlaneseq
        %v335 = vshrl.u32 %v334, 7
        %v336 = vsub.s32 0, %v335
        %v337 = vrot.slane %v332, %v336
        %v338 = vlaneseq
        %v339 = vshrl.u32 %v338, 7
        %v340 = vsub.s32 1, %v339
        %v341 = vrot.slane %v332, %v340
        %v344 = vmul.f32 %v331, %v337
        %v345 = vmul.f32 %v330, %v341
        %346 = vst [vmem:[#allocation2] sm:$0xff] %v344
        %347 = vst [vmem:[#allocation2 + $0x8] sm:$0xff] %v345
        %348 = vrot.lane.b32.xlu0 %v321, 16
        %v349 = vpop.permute.xlu0 %348
        %350 = vrot.lane.b32.xlu0 %v322, 16
        %v351 = vpop.permute.xlu0 %350
        %vm352 = vcmp.lt.s32.totalorder %v328, 16
        %v353 = vsel %vm352, %v349, %v351
        %v354 = vsel %vm352, %v351, %v349
        %s355 = scalar_lea.vmem [#allocation6], 2
        %v356 = vld [vmem:[%s355] sm:$0x3]
        %v358 = vlaneseq
        %v359 = vshrl.u32 %v358, 7
        %v360 = vsub.s32 0, %v359
        %v361 = vrot.slane %v356, %v360
        %v362 = vlaneseq
        %v363 = vshrl.u32 %v362, 7
        %v364 = vsub.s32 1, %v363
        %v365 = vrot.slane %v356, %v364
        %v368 = vmul.f32 %v354, %v361
        %v369 = vmul.f32 %v353, %v365
        %370 = vst [vmem:[#allocation2 + $0x10] sm:$0xff] %v368
        %371 = vst [vmem:[#allocation2 + $0x18] sm:$0xff] %v369
        %372 = vrot.lane.b32.xlu0 %v321, 15
        %v373 = vpop.permute.xlu0 %372
        %374 = vrot.lane.b32.xlu0 %v322, 15
        %v375 = vpop.permute.xlu0 %374
        %vm376 = vcmp.lt.s32.totalorder %v328, 15
        %v377 = vsel %vm376, %v373, %v375
        %v378 = vsel %vm376, %v375, %v373
        %s379 = scalar_lea.vmem [#allocation6], 4
        %v380 = vld [vmem:[%s379] sm:$0x3]
        %v382 = vlaneseq
        %v383 = vshrl.u32 %v382, 7
        %v384 = vsub.s32 0, %v383
        %v385 = vrot.slane %v380, %v384
        %v386 = vlaneseq
        %v387 = vshrl.u32 %v386, 7
        %v388 = vsub.s32 1, %v387
        %v389 = vrot.slane %v380, %v388
        %v392 = vmul.f32 %v378, %v385
        %v393 = vmul.f32 %v377, %v389
        %394 = vst [vmem:[#allocation2 + $0x20] sm:$0xff] %v392
        %395 = vst [vmem:[#allocation2 + $0x28] sm:$0xff] %v393
        %396 = vrot.lane.b32.xlu0 %v321, 1
        %v397 = vpop.permute.xlu0 %396
        %398 = vrot.lane.b32.xlu0 %v322, 1
        %v399 = vpop.permute.xlu0 %398
        %vm400 = vcmp.lt.s32.totalorder %v328, 1
        %v401 = vsel %vm400, %v397, %v399
        %v402 = vsel %vm400, %v399, %v397
        %s403 = scalar_lea.vmem [#allocation6], 6
        %v404 = vld [vmem:[%s403] sm:$0x3]
        %v406 = vlaneseq
        %v407 = vshrl.u32 %v406, 7
        %v408 = vsub.s32 0, %v407
        %v409 = vrot.slane %v404, %v408
        %v410 = vlaneseq
        %v411 = vshrl.u32 %v410, 7
        %v412 = vsub.s32 1, %v411
        %v413 = vrot.slane %v404, %v412
        %v416 = vmul.f32 %v402, %v409
        %v417 = vmul.f32 %v401, %v413
        %418 = vst [vmem:[#allocation2 + $0x30] sm:$0xff] %v416
        %419 = vst [vmem:[#allocation2 + $0x38] sm:$0xff] %v417
        %420 = vst [vmem:[#allocation2 + $0x40] sm:$0xff] %v321
        %421 = vst [vmem:[#allocation2 + $0x48] sm:$0xff] %v322
        %422 = vrot.lane.b32.xlu0 %v321, 127
        %v423 = vpop.permute.xlu0 %422
        %424 = vrot.lane.b32.xlu0 %v322, 127
        %v425 = vpop.permute.xlu0 %424
        %vm426 = vcmp.lt.s32.totalorder %v328, 127
        %v427 = vsel %vm426, %v423, %v425
        %v428 = vsel %vm426, %v425, %v423
        %s429 = scalar_lea.vmem [#allocation6], 10
        %v430 = vld [vmem:[%s429] sm:$0x3]
        %v432 = vlaneseq
        %v433 = vshrl.u32 %v432, 7
        %v434 = vsub.s32 0, %v433
        %v435 = vrot.slane %v430, %v434
        %v436 = vlaneseq
        %v437 = vshrl.u32 %v436, 7
        %v438 = vsub.s32 1, %v437
        %v439 = vrot.slane %v430, %v438
        %v442 = vmul.f32 %v427, %v435
        %v443 = vmul.f32 %v428, %v439
        %444 = vst [vmem:[#allocation2 + $0x50] sm:$0xff] %v442
        %445 = vst [vmem:[#allocation2 + $0x58] sm:$0xff] %v443
        %446 = vrot.lane.b32.xlu0 %v321, 113
        %v447 = vpop.permute.xlu0 %446
        %448 = vrot.lane.b32.xlu0 %v322, 113
        %v449 = vpop.permute.xlu0 %448
        %vm450 = vcmp.lt.s32.totalorder %v328, 113
        %v451 = vsel %vm450, %v447, %v449
        %v452 = vsel %vm450, %v449, %v447
        %s453 = scalar_lea.vmem [#allocation6], 12
        %v454 = vld [vmem:[%s453] sm:$0x3]
        %v456 = vlaneseq
        %v457 = vshrl.u32 %v456, 7
        %v458 = vsub.s32 0, %v457
        %v459 = vrot.slane %v454, %v458
        %v460 = vlaneseq
        %v461 = vshrl.u32 %v460, 7
        %v462 = vsub.s32 1, %v461
        %v463 = vrot.slane %v454, %v462
        %v466 = vmul.f32 %v451, %v459
        %v467 = vmul.f32 %v452, %v463
        %468 = vst [vmem:[#allocation2 + $0x60] sm:$0xff] %v466
        %469 = vst [vmem:[#allocation2 + $0x68] sm:$0xff] %v467
        %470 = vrot.lane.b32.xlu0 %v321, 112
        %v471 = vpop.permute.xlu0 %470
        %472 = vrot.lane.b32.xlu0 %v322, 112
        %v473 = vpop.permute.xlu0 %472
        %vm474 = vcmp.lt.s32.totalorder %v328, 112
        %v475 = vsel %vm474, %v471, %v473
        %v476 = vsel %vm474, %v473, %v471
        %s477 = scalar_lea.vmem [#allocation6], 14
        %v478 = vld [vmem:[%s477] sm:$0x3]
        %v480 = vlaneseq
        %v481 = vshrl.u32 %v480, 7
        %v482 = vsub.s32 0, %v481
        %v483 = vrot.slane %v478, %v482
        %v484 = vlaneseq
        %v485 = vshrl.u32 %v484, 7
        %v486 = vsub.s32 1, %v485
        %v487 = vrot.slane %v478, %v486
        %v490 = vmul.f32 %v475, %v483
        %v491 = vmul.f32 %v476, %v487
        %492 = vst [vmem:[#allocation2 + $0x70] sm:$0xff] %v490
        %493 = vst [vmem:[#allocation2 + $0x78] sm:$0xff] %v491
        %494 = vrot.lane.b32.xlu0 %v321, 111
        %v495 = vpop.permute.xlu0 %494
        %496 = vrot.lane.b32.xlu0 %v322, 111
        %v497 = vpop.permute.xlu0 %496
        %vm498 = vcmp.lt.s32.totalorder %v328, 111
        %v499 = vsel %vm498, %v495, %v497
        %v500 = vsel %vm498, %v497, %v495
        %s501 = scalar_lea.vmem [#allocation6], 16
        %v502 = vld [vmem:[%s501] sm:$0x3]
        %v504 = vlaneseq
        %v505 = vshrl.u32 %v504, 7
        %v506 = vsub.s32 0, %v505
        %v507 = vrot.slane %v502, %v506
        %v508 = vlaneseq
        %v509 = vshrl.u32 %v508, 7
        %v510 = vsub.s32 1, %v509
        %v511 = vrot.slane %v502, %v510
        %v514 = vmul.f32 %v499, %v507
        %v515 = vmul.f32 %v500, %v511
        %516 = vst [vmem:[#allocation2 + $0x80] sm:$0xff] %v514
        %517 = vst [vmem:[#allocation2 + $0x88] sm:$0xff] %v515
        %v518 = vld [vmem:[%s2] sm:$0xff]
        %v519 = vld [vmem:[#allocation2] sm:$0xff]
        %v520 = vld [vmem:[#allocation2 + $0x8] sm:$0xff]
        %v521 = vld [vmem:[#allocation2 + $0x10] sm:$0xff]
        %v522 = vld [vmem:[#allocation2 + $0x18] sm:$0xff]
        %v523 = vld [vmem:[#allocation2 + $0x20] sm:$0xff]
        %v524 = vld [vmem:[#allocation2 + $0x28] sm:$0xff]
        %v525 = vld [vmem:[#allocation2 + $0x30] sm:$0xff]
        %v526 = vld [vmem:[#allocation2 + $0x38] sm:$0xff]
        %v527 = vld [vmem:[#allocation2 + $0x40] sm:$0xff]
        %v528 = vld [vmem:[#allocation2 + $0x48] sm:$0xff]
        %v529 = vld [vmem:[#allocation2 + $0x50] sm:$0xff]
        %v530 = vld [vmem:[#allocation2 + $0x58] sm:$0xff]
        %v531 = vld [vmem:[#allocation2 + $0x60] sm:$0xff]
        %v532 = vld [vmem:[#allocation2 + $0x68] sm:$0xff]
        %v533 = vld [vmem:[#allocation2 + $0x70] sm:$0xff]
        %v534 = vld [vmem:[#allocation2 + $0x78] sm:$0xff]
        %v535 = vld [vmem:[#allocation2 + $0x80] sm:$0xff]
        %v536 = vld [vmem:[#allocation2 + $0x88] sm:$0xff]
        %v537 = vld [vmem:[%s3] sm:$0xff]
        %539 = vset.pattern.permute.xlu0 0
        %540 = vperm.xlu0 %539, %v537
        %v541 = vpop.permute.xlu0 %540
        %vm543 = vcmask 588800
        %v545 = vsel %vm543, %v518, 0
        %547 = vmatprep.subr.mxu0 %v520
        %548 = vmatpush1.msra.mxu0 %v519
        %549 = vmatprep.subr.mxu0 %v522
        %550 = vmatpush1.msra.mxu0 %v521
        %551 = vmatprep.subr.mxu0 %v524
        %552 = vmatpush1.msra.mxu0 %v523
        %553 = vmatprep.subr.mxu0 %v526
        %554 = vmatpush1.msra.mxu0 %v525
        %555 = vmatprep.subr.mxu0 %v528
        %556 = vmatpush1.msra.mxu0 %v527
        %557 = vmatprep.subr.mxu0 %v530
        %558 = vmatpush1.msra.mxu0 %v529
        %559 = vmatprep.subr.mxu0 %v532
        %560 = vmatpush1.msra.mxu0 %v531
        %561 = vmatprep.subr.mxu0 %v534
        %562 = vmatpush1.msra.mxu0 %v533
        %563 = vmatprep.subr.mxu0 %v536
        %564 = vmatpush1.msra.mxu0 %v535
        %565 = vmatprep.subr.mxu0 0.0
        %566 = vmatpush1.msra.mxu0 0.0
        %567 = vmatprep.subr.mxu0 0.0
        %568 = vmatpush1.msra.mxu0 0.0
        %569 = vmatprep.subr.mxu0 0.0
        %570 = vmatpush1.msra.mxu0 0.0
        %571 = vmatprep.subr.mxu0 0.0
        %572 = vmatpush1.msra.mxu0 0.0
        %573 = vmatprep.subr.mxu0 0.0
        %574 = vmatpush1.msra.mxu0 0.0
        %575 = vmatprep.subr.mxu0 0.0
        %576 = vmatpush1.msra.mxu0 0.0
        %577 = vmatprep.subr.mxu0 0.0
        %578 = vmatpush1.msra.mxu0 0.0
        %579 = vmatprep.subr.mxu0 0.0
        %580 = vmatpush1.msra.mxu0 0.0
        %581 = vmatprep.subr.mxu0 0.0
        %582 = vmatpush1.msra.mxu0 0.0
        %583 = vmatprep.subr.mxu0 0.0
        %584 = vmatpush1.msra.mxu0 0.0
        %585 = vmatprep.subr.mxu0 0.0
        %586 = vmatpush1.msra.mxu0 0.0
        %587 = vmatprep.subr.mxu0 0.0
        %588 = vmatpush1.msra.mxu0 0.0
        %589 = vmatprep.subr.mxu0 0.0
        %590 = vmatpush1.msra.mxu0 0.0
        %591 = vmatprep.subr.mxu0 0.0
        %592 = vmatpush1.msra.mxu0 0.0
        %593 = vmatprep.subr.mxu0 0.0
        %594 = vmatpush1.msra.mxu0 0.0
        %595 = vmatprep.subr.mxu0 0.0
        %596 = vmatpush1.msra.mxu0 0.0
        %597 = vmatprep.subr.mxu0 0.0
        %598 = vmatpush1.msra.mxu0 0.0
        %599 = vmatprep.subr.mxu0 0.0
        %600 = vmatpush1.msra.mxu0 0.0
        %601 = vmatprep.subr.mxu0 0.0
        %602 = vmatpush1.msra.mxu0 0.0
        %603 = vmatprep.subr.mxu0 0.0
        %604 = vmatpush1.msra.mxu0 0.0
        %605 = vmatprep.subr.mxu0 0.0
        %606 = vmatpush1.msra.mxu0 0.0
        %607 = vmatprep.subr.mxu0 0.0
        %608 = vmatpush1.msra.mxu0 0.0
        %609 = vmatprep.subr.mxu0 0.0
        %610 = vmatpush1.msra.mxu0 0.0
        %611 = vmatprep.mubr.f32.mxu0 0.0
        %612 = vmatmul.mubr.f32.gmra.mrb[0].mxu0 %v545
        %v613 = vpop.f32.mrb[0].mxu0
        %v614 = vadd.f32 %v541, %v613
        %v615 = vpop.f32.mrb[0].mxu0
        %v616 = vadd.f32 %v541, %v615
        %617 = vdwg.mxu0
        %v618 = vmax.f32 %v614, 0.0
        %v619 = vmax.f32 %v616, 0.0
        %620 = vst [vmem:[%s313] sm:$0xff] %v618
        %621 = vst [vmem:[%s313 + $0x8] sm:$0xff] %v619
        %v622 = vadd.f32 %v618, %v619
        %623 = vadd.xlane.f32.xlu0 %v622
        %v624 = vpop.xlane.xlu0 %623
        %v625 = vld [vmem:[%s4] sm:$0xff]
        %v626 = vmul.f32 %v624, %v625
        %vm627 = vcmask 80896
        %v628 = vsel %vm627, %v626, 0.0
        %v629 = vrot.slane %v628, 4
        %v630 = vadd.f32 %v628, %v629
        %v631 = vrot.slane %v630, 2
        %v632 = vadd.f32 %v630, %v631
        %v633 = vrot.slane %v632, 1
        %v634 = vadd.f32 %v632, %v633
        %v635 = vld [vmem:[%s5] sm:$0x1]
        %v636 = vadd.f32 %v634, %v635
        %vm637 = vcmask 73728
        %v638 = vsel %vm637, %v636, -inf
        %639 = vmax.xlane.f32.xlu0 %v638
        %v640 = vpop.xlane.xlu0 %639
        %v641 = vsub.f32 %v636, %v640
        %v642 = vmul.f32 %v641, 1.442695
        %v643 = vpow.pop %v642
        %v644 = vsel %vm637, %v643, 0.0
        %645 = vadd.xlane.f32.xlu0 %v644
        %v646 = vpop.xlane.xlu0 %645
        %v647 = vrcp.pop %v646
        %v648 = vmul.f32 %v643, %v647
        %649 = vst.msk [vmem:[%s320] sm:$0x1] %vm637, %v636
        %650 = vst.msk [vmem:[%s320 + $0x1] sm:$0x1] %vm637, %v648
        %s651 = sand.u32 %s168, 1
        %s652 = scalar_lea.sflag [#allocation5], %s651
        %s653 = sand.u32 %s168, 1
        %s654 = smul.addr %s653, 16
        %s655 = scalar_lea.vmem [#allocation8], %s654
        %s656 = sand.u32 %s194, 1
        %s657 = scalar_lea.sflag [#allocation10], %s656
        %s658 = sand.u32 %s194, 1
        %s659 = smul.addr %s658, 2
        %s660 = scalar_lea.vmem [#allocation9], %s659
        // Predicated region
        $region53: #{tpu_custom_call.1} parent=43 // pred_check
          %p661 = pneg %p178
        $region54: #{tpu_custom_call.1} parent=43 // pred_check_branch
          %663 = sbr.rel (%p661) target = $region56
        $region55: #{tpu_custom_call.1} parent=43 // pred_region
          %s665 = ssub.s32 256, 256
          %666 = vsyncadd %s652, %s665
          %s667 = smul.addr %s29, 2
          %s668 = smul.addr %s667, 128
          %s669 = scalar_lea.hbm %s6, %s668
          %s671 = sshll.u32 %s655, 4
          %s672 = int_to_ptr.vmem [resolvable:$true] %s671
          %674 = dma.vmem_to_hbm [thread:$0]  %s672, 256, %s669, %s652
        $region56: #{tpu_custom_call.1} parent=43 // pred_fallthru
          _
        // Predicated region
        $region57: #{tpu_custom_call.1} parent=43 // pred_check
          %p675 = pneg %p204
        $region58: #{tpu_custom_call.1} parent=43 // pred_check_branch
          %677 = sbr.rel (%p675) target = $region60
        $region59: #{tpu_custom_call.1} parent=43 // pred_region
          %s679 = ssub.s32 32, 32
          %680 = vsyncadd %s657, %s679
          %s681 = smul.addr %s29, 32
          %s682 = scalar_lea.hbm %s7, %s681
          %s684 = sshll.u32 %s660, 4
          %s685 = int_to_ptr.vmem [resolvable:$true] %s684
          %687 = dma.vmem_to_hbm [thread:$0]  %s685, 32, %s682, %s657
        $region60: #{tpu_custom_call.1} parent=43 // pred_fallthru
          _
      $region44: #{tpu_custom_call.1} parent=5 // pred_fallthru
        _
      %p688 = scmp.le.s32.totalorder 2, %s24
      // Predicated region
      $region61: #{tpu_custom_call.1} parent=5 // pred_check
        %p689 = pneg %p688
      $region62: #{tpu_custom_call.1} parent=5 // pred_check_branch
        %691 = sbr.rel (%p689) target = $region64
      $region63: #{tpu_custom_call.1} parent=5 // pred_region
        %s692 = ssub.s32 %s24, 2
        // Predicated region
        $region65: #{tpu_custom_call.1} parent=63 // pred_check
          %p693 = pneg %p184
        $region66: #{tpu_custom_call.1} parent=63 // pred_check_branch
          %695 = sbr.rel (%p693) target = $region68
        $region67: #{tpu_custom_call.1} parent=63 // pred_region
          %s696 = sand.u32 %s169, 1
          %s697 = scalar_lea.sflag [#allocation5], %s696
          %s698 = sand.u32 %s169, 1
          %s699 = smul.addr %s698, 16
          %s700 = scalar_lea.vmem [#allocation8], %s699
          %701 = dma.done %s697, 256
        $region68: #{tpu_custom_call.1} parent=63 // pred_fallthru
          _
        // Predicated region
        $region69: #{tpu_custom_call.1} parent=63 // pred_check
          %p702 = pneg %p210
        $region70: #{tpu_custom_call.1} parent=63 // pred_check_branch
          %704 = sbr.rel (%p702) target = $region72
        $region71: #{tpu_custom_call.1} parent=63 // pred_region
          %s705 = sand.u32 %s195, 1
          %s706 = scalar_lea.sflag [#allocation10], %s705
          %s707 = sand.u32 %s195, 1
          %s708 = smul.addr %s707, 2
          %s709 = scalar_lea.vmem [#allocation9], %s708
          %710 = dma.done %s706, 32
        $region72: #{tpu_custom_call.1} parent=63 // pred_fallthru
          _
      $region64: #{tpu_custom_call.1} parent=5 // pred_fallthru
        _
    $region6: #{tpu_custom_call.1} parent=1 // loop_footer
      %s28 = sadd.s32 1, %s24
    $region7: #{tpu_custom_call.1} parent=1 // loop_footer_branch
      %23 = sbr.rel target = $region3
    $region8: #{tpu_custom_call.1} parent=1 // loop_exit
      _
    %711 = vsyncpa [#allocation4], 1
    %s712 = scalar_lea.sflag [#allocation4], 1
    %713 = vsyncpa %s712, 1
    %714 = vsyncpa [#allocation7], 1
    %715 = vsyncpa [#allocation5], 1
    %s716 = scalar_lea.sflag [#allocation5], 1
    %717 = vsyncpa %s716, 1
    %718 = vsyncpa [#allocation10], 1
    %s719 = scalar_lea.sflag [#allocation10], 1
    %720 = vsyncpa %s719, 1

</llo_original>
